<compile_context>
chip_gen: v5e
topology: v5e:2x2
jax: 0.10.0
libtpu: 0.0.40
codegen_flags: <defaults>
</compile_context>

<pallas_src>
import math

import jax
import jax.numpy as jnp
from jax.experimental import pallas as pl
from jax.experimental.pallas import tpu as pltpu

_LANE = 128
_SUBLANE = 8


def _round_up(x, m):
    return (x + m - 1) // m * m


def _actor_critic_kernel(obs_ref, w1_ref, b1_ref, w2_ref, b2_ref,
                         wh_ref, bh_ref, head_ref):
    """Fused 2-layer tanh trunk + (actor_mean | critic) head for one batch tile."""
    # ---- shared trunk: two Linear+Tanh layers.  MXU dots accumulate in f32;
    #      bias add + tanh stay in f32 (VPU/EUP), so the elementwise path is
    #      v5e-safe even when the operands are bf16.
    h1 = jnp.tanh(
        jnp.dot(obs_ref[...], w1_ref[...], preferred_element_type=jnp.float32)
        + b1_ref[...])
    h2 = jnp.tanh(
        jnp.dot(h1.astype(w2_ref.dtype), w2_ref[...],
                preferred_element_type=jnp.float32)
        + b2_ref[...])
    # ---- fused actor-mean + critic head: one lane-dense (TB, OUT_pad) matmul,
    #      then store only the OUT = A+1 useful columns (narrow masked store;
    #      the HBM writeback saving dominates).
    head = (jnp.dot(h2.astype(wh_ref.dtype), wh_ref[...],
                    preferred_element_type=jnp.float32)
            + bh_ref[...])
    head_ref[...] = head[:, :head_ref.shape[-1]]


def prepare_params(params, compute_dtype=jnp.bfloat16):
    """One-time layout prep: fuse actor+critic heads, zero-pad hidden dims to
    128 lanes (numerically exact), cast weights, and precompute exp(log_std).

    params: w1 (D,H), b1 (1,H), w2 (H,H), b2 (1,H), wa (H,A), ba (1,A),
            wc (H,1), bc (1,1), log_std (1,A).  Linear weights stored (in, out),
            i.e. transposed vs. PyTorch.
    """
    f32 = jnp.float32
    D, H = params["w1"].shape
    A = params["wa"].shape[1]
    OUT = A + 1
    H_pad = _round_up(H, _LANE)
    OUT_pad = _round_up(OUT, _LANE)

    def pad2(x, rows, cols, dtype):
        x = x.astype(dtype)
        return jnp.pad(x, ((0, rows - x.shape[0]), (0, cols - x.shape[1])))

    wh = jnp.concatenate([params["wa"], params["wc"]], axis=1)   # (H, A+1)
    bh = jnp.concatenate([params["ba"], params["bc"]], axis=1)   # (1, A+1)

    return {
        # D (the layer-1 contraction dim) is deliberately NOT padded: the
        # kernel uses full-dim blocks for it, keeping obs DMA bytes minimal.
        "w1": pad2(params["w1"], D, H_pad, compute_dtype),       # (D, H_pad)
        "b1": pad2(params["b1"], 1, H_pad, f32),
        "w2": pad2(params["w2"], H_pad, H_pad, compute_dtype),
        "b2": pad2(params["b2"], 1, H_pad, f32),
        "wh": pad2(wh, H_pad, OUT_pad, compute_dtype),           # fused head
        "bh": pad2(bh, 1, OUT_pad, f32),
        "action_std": jnp.exp(params["log_std"]).reshape(A).astype(f32),
        "action_dim": A,
        "hidden_dim": H,
        "input_dim": D,
        "compute_dtype": compute_dtype,
    }


def actor_critic_forward(obs, prepared, *, block_b=1024, vmem_limit_bytes=None):
    """ActorCriticPolicy.forward for Box action spaces.

    obs: (B, D) float32; `prepared` comes from prepare_params().
    Returns (action_mean (B, A), action_std (A,), values (B, 1)).
    """
    B, D = obs.shape
    A = prepared["action_dim"]
    H = prepared["hidden_dim"]
    OUT = A + 1
    compute_dtype = prepared["compute_dtype"]
    H_pad = prepared["w1"].shape[1]
    OUT_pad = prepared["wh"].shape[1]
    assert prepared["input_dim"] == D

    itemsize = jnp.dtype(compute_dtype).itemsize
    # Sublane alignment for the batch tile (8 rows f32, 16 rows bf16, ...).
    row_align = _SUBLANE * max(1, 4 // itemsize)
    # Batch tile: big enough to amortize the ~0.35us/step grid overhead, but
    # clamped (and aligned) for small batches.
    TB = _round_up(min(block_b, _round_up(B, row_align)), row_align)
    grid = (pl.cdiv(B, TB),)   # trailing partial tile handled by edge clipping

    obs_c = obs.astype(compute_dtype)     # no-op for f32; halves DMA for bf16

    const = lambda i: (0, 0)       # weights/biases: VMEM-resident across steps
    batch_row = lambda i: (i, 0)   # obs / output: tiled over the batch

    # Advisory cost estimate with the real (unpadded) work / traffic.
    w_bytes = (prepared["w1"].size + prepared["w2"].size
               + prepared["wh"].size) * itemsize
    b_bytes = (prepared["b1"].size + prepared["b2"].size
               + prepared["bh"].size) * 4
    cost = pl.CostEstimate(
        flops=2 * B * (D * H + H * H + H * OUT),
        transcendentals=2 * B * H,
        bytes_accessed=B * D * itemsize + w_bytes + b_bytes + B * OUT * 4)

    compiler_params = pltpu.CompilerParams(
        # v7x note: if a plain "parallel" batch axis doesn't split across the
        # two TensorCores, switch to pltpu.CORE_PARALLEL and keep >=2 grid
        # steps.  For very large hidden sizes pass vmem_limit_bytes (or
        # single-buffer the constant weights with pipeline_mode=pl.Buffered(1)).
        dimension_semantics=("parallel",),
        vmem_limit_bytes=vmem_limit_bytes)

    head = pl.pallas_call(
        _actor_critic_kernel,
        out_shape=jax.ShapeDtypeStruct((B, OUT), jnp.float32),
        grid=grid,
        in_specs=[
            pl.BlockSpec((TB, D), batch_row),        # obs tile (D unpadded)
            pl.BlockSpec((D, H_pad), const),         # W1
            pl.BlockSpec((1, H_pad), const),         # b1
            pl.BlockSpec((H_pad, H_pad), const),     # W2
            pl.BlockSpec((1, H_pad), const),         # b2
            pl.BlockSpec((H_pad, OUT_pad), const),   # fused head weight
            pl.BlockSpec((1, OUT_pad), const),       # fused head bias
        ],
        out_specs=pl.BlockSpec((TB, OUT), batch_row),  # narrow (A+1) writeback
        compiler_params=compiler_params,
        cost_estimate=cost,
    )(obs_c, prepared["w1"], prepared["b1"], prepared["w2"], prepared["b2"],
      prepared["wh"], prepared["bh"])

    action_mean = head[:, :A]
    values = head[:, A:A + 1]
    return action_mean, prepared["action_std"], values


def init_params(key, input_dim, hidden_size, action_dim):
    """Deterministic init mirroring nn.Linear's default U(-1/sqrt(in), 1/sqrt(in))."""
    keys = jax.random.split(key, 8)

    def linear(kw, kb, fan_in, fan_out):
        bound = 1.0 / math.sqrt(fan_in)
        w = jax.random.uniform(kw, (fan_in, fan_out), jnp.float32, -bound, bound)
        b = jax.random.uniform(kb, (1, fan_out), jnp.float32, -bound, bound)
        return w, b

    w1, b1 = linear(keys[0], keys[1], input_dim, hidden_size)
    w2, b2 = linear(keys[2], keys[3], hidden_size, hidden_size)
    wa, ba = linear(keys[4], keys[5], hidden_size, action_dim)
    wc, bc = linear(keys[6], keys[7], hidden_size, 1)
    log_std = jnp.zeros((1, action_dim), jnp.float32)   # torch.zeros(action_dim)
    return {
        "w1": w1, "b1": b1,
        "w2": w2, "b2": b2,
        "wa": wa, "ba": ba,
        "wc": wc, "bc": bc,
        "log_std": log_std,
    }


def reference_forward(obs, p):
    h1 = jnp.tanh(obs @ p["w1"] + p["b1"])
    h2 = jnp.tanh(h1 @ p["w2"] + p["b2"])
    mean = h2 @ p["wa"] + p["ba"]
    std = jnp.exp(p["log_std"]).reshape(-1)
    values = h2 @ p["wc"] + p["bc"]
    return mean, std, values


if __name__ == "__main__":
    # Small shapes consistent with the module:
    #   observation_space.shape = (16,) -> input_dim = 16
    #   hidden_size = 64 (module default)
    #   action_space = Box(shape=(4,)) -> action_dim = 4
    #   batch = 16 (block_b=8 exercises a 2-step batch grid in the f32 path)
    B, D, H, A = 16, 16, 64, 4

    key = jax.random.PRNGKey(0)
    k_obs, k_params = jax.random.split(key)
    obs = jax.random.normal(k_obs, (B, D), dtype=jnp.float32)
    params = init_params(k_params, D, H, A)
    r_mean, r_std, r_values = reference_forward(obs, params)

    # --- exact f32 operand path (tight tolerance, 2-step batch grid) ---
    prep_f32 = prepare_params(params, compute_dtype=jnp.float32)
    mean, std, values = actor_critic_forward(obs, prep_f32, block_b=8)
    jax.block_until_ready((mean, std, values))
    assert mean.shape == (B, A) and std.shape == (A,) and values.shape == (B, 1)
    assert jnp.allclose(mean, r_mean, atol=1e-5)
    assert jnp.allclose(std, r_std, atol=1e-6)
    assert jnp.allclose(values, r_values, atol=1e-5)

    # --- default bf16 operand path (f32 accumulation), looser tolerance ---
    prep_bf16 = prepare_params(params)   # compute_dtype=jnp.bfloat16 default
    mean_b, std_b, values_b = actor_critic_forward(obs, prep_bf16, block_b=16)
    jax.block_until_ready((mean_b, std_b, values_b))
    assert jnp.allclose(mean_b, r_mean, atol=5e-2)
    assert jnp.allclose(values_b, r_values, atol=5e-2)
    assert jnp.allclose(std_b, r_std, atol=1e-6)

    print("KERNEL_OK")
</pallas_src>

<mosaic_0001>
module attributes {stable_mosaic.version = 11 : i64} {
  func.func @_actor_critic_kernel(%arg0: i32, %arg1: memref<8x16xf32, #tpu.memory_space<vmem>>, %arg2: memref<16x128xf32, #tpu.memory_space<vmem>>, %arg3: memref<1x128xf32, #tpu.memory_space<vmem>>, %arg4: memref<128x128xf32, #tpu.memory_space<vmem>>, %arg5: memref<1x128xf32, #tpu.memory_space<vmem>>, %arg6: memref<128x128xf32, #tpu.memory_space<vmem>>, %arg7: memref<1x128xf32, #tpu.memory_space<vmem>>, %arg8: memref<8x5xf32, #tpu.memory_space<vmem>>) attributes {dimension_semantics = [#tpu.dimension_semantics<parallel>], iteration_bounds = array<i64: 2>, scalar_prefetch = 0 : i64, scratch_operands = 0 : i64, tpu.core_type = #tpu.core_type<tc>, window_params = [{transform_indices = @transform_0, window_bounds = array<i64: 8, 16>}, {pipeline_mode = #tpu.pipeline_mode<synchronous>, transform_indices = @transform_1, window_bounds = array<i64: 16, 128>}, {pipeline_mode = #tpu.pipeline_mode<synchronous>, transform_indices = @transform_2, window_bounds = array<i64: 1, 128>}, {pipeline_mode = #tpu.pipeline_mode<synchronous>, transform_indices = @transform_3, window_bounds = array<i64: 128, 128>}, {pipeline_mode = #tpu.pipeline_mode<synchronous>, transform_indices = @transform_4, window_bounds = array<i64: 1, 128>}, {pipeline_mode = #tpu.pipeline_mode<synchronous>, transform_indices = @transform_5, window_bounds = array<i64: 128, 128>}, {pipeline_mode = #tpu.pipeline_mode<synchronous>, transform_indices = @transform_6, window_bounds = array<i64: 1, 128>}, {transform_indices = @transform_7, window_bounds = array<i64: 8, 5>}]} {
    %c0 = arith.constant 0 : index
    %c0_0 = arith.constant 0 : index
    %0 = vector.load %arg1[%c0, %c0_0] : memref<8x16xf32, #tpu.memory_space<vmem>>, vector<8x16xf32>
    %c0_1 = arith.constant 0 : index
    %c0_2 = arith.constant 0 : index
    %1 = vector.load %arg2[%c0_1, %c0_2] : memref<16x128xf32, #tpu.memory_space<vmem>>, vector<16x128xf32>
    %cst = arith.constant dense<0.000000e+00> : vector<8x128xf32>
    %2 = tpu.matmul %0, %1, %cst {dimension_numbers = #tpu.dot_dimension_numbers<[1], [0], [0], [1], [0, 0, 1, 1], [], []>} : vector<8x16xf32>, vector<16x128xf32>, vector<8x128xf32> -> vector<8x128xf32>
    %c0_3 = arith.constant 0 : index
    %c0_4 = arith.constant 0 : index
    %3 = vector.load %arg3[%c0_3, %c0_4] : memref<1x128xf32, #tpu.memory_space<vmem>>, vector<1x128xf32>
    %4 = vector.broadcast %3 : vector<1x128xf32> to vector<8x128xf32>
    %5 = arith.addf %2, %4 : vector<8x128xf32>
    %6 = math.tanh %5 : vector<8x128xf32>
    %c0_5 = arith.constant 0 : index
    %c0_6 = arith.constant 0 : index
    %7 = vector.load %arg4[%c0_5, %c0_6] : memref<128x128xf32, #tpu.memory_space<vmem>>, vector<128x128xf32>
    %cst_7 = arith.constant dense<0.000000e+00> : vector<8x128xf32>
    %8 = tpu.matmul %6, %7, %cst_7 {dimension_numbers = #tpu.dot_dimension_numbers<[1], [0], [0], [1], [0, 0, 1, 1], [], []>} : vector<8x128xf32>, vector<128x128xf32>, vector<8x128xf32> -> vector<8x128xf32>
    %c0_8 = arith.constant 0 : index
    %c0_9 = arith.constant 0 : index
    %9 = vector.load %arg5[%c0_8, %c0_9] : memref<1x128xf32, #tpu.memory_space<vmem>>, vector<1x128xf32>
    %10 = vector.broadcast %9 : vector<1x128xf32> to vector<8x128xf32>
    %11 = arith.addf %8, %10 : vector<8x128xf32>
    %12 = math.tanh %11 : vector<8x128xf32>
    %c0_10 = arith.constant 0 : index
    %c0_11 = arith.constant 0 : index
    %13 = vector.load %arg6[%c0_10, %c0_11] : memref<128x128xf32, #tpu.memory_space<vmem>>, vector<128x128xf32>
    %cst_12 = arith.constant dense<0.000000e+00> : vector<8x128xf32>
    %14 = tpu.matmul %12, %13, %cst_12 {dimension_numbers = #tpu.dot_dimension_numbers<[1], [0], [0], [1], [0, 0, 1, 1], [], []>} : vector<8x128xf32>, vector<128x128xf32>, vector<8x128xf32> -> vector<8x128xf32>
    %c0_13 = arith.constant 0 : index
    %c0_14 = arith.constant 0 : index
    %15 = vector.load %arg7[%c0_13, %c0_14] : memref<1x128xf32, #tpu.memory_space<vmem>>, vector<1x128xf32>
    %16 = vector.broadcast %15 : vector<1x128xf32> to vector<8x128xf32>
    %17 = arith.addf %14, %16 : vector<8x128xf32>
    %18 = vector.extract_strided_slice %17 {offsets = [0, 0], sizes = [8, 5], strides = [1, 1]} : vector<8x128xf32> to vector<8x5xf32>
    %c0_15 = arith.constant 0 : index
    %c0_16 = arith.constant 0 : index
    %19 = vector.load %arg8[%c0_15, %c0_16] : memref<8x5xf32, #tpu.memory_space<vmem>>, vector<8x5xf32>
    tpu.vector_store %arg8[%c0_15, %c0_16], %18 {strides = array<i32>} : memref<8x5xf32, #tpu.memory_space<vmem>>, vector<8x5xf32>,
    return
  }
  func.func @transform_0(%arg0: i32) -> (i32, i32) {
    %c0_i32 = arith.constant 0 : i32
    %c0_i32_0 = arith.constant 0 : i32
    return %arg0, %c0_i32 : i32, i32
  }
  func.func @transform_1(%arg0: i32) -> (i32, i32) {
    %c0_i32 = arith.constant 0 : i32
    %c0_i32_0 = arith.constant 0 : i32
    %c0_i32_1 = arith.constant 0 : i32
    return %c0_i32, %c0_i32_0 : i32, i32
  }
  func.func @transform_2(%arg0: i32) -> (i32, i32) {
    %c0_i32 = arith.constant 0 : i32
    %c0_i32_0 = arith.constant 0 : i32
    %c0_i32_1 = arith.constant 0 : i32
    return %c0_i32, %c0_i32_0 : i32, i32
  }
  func.func @transform_3(%arg0: i32) -> (i32, i32) {
    %c0_i32 = arith.constant 0 : i32
    %c0_i32_0 = arith.constant 0 : i32
    %c0_i32_1 = arith.constant 0 : i32
    return %c0_i32, %c0_i32_0 : i32, i32
  }
  func.func @transform_4(%arg0: i32) -> (i32, i32) {
    %c0_i32 = arith.constant 0 : i32
    %c0_i32_0 = arith.constant 0 : i32
    %c0_i32_1 = arith.constant 0 : i32
    return %c0_i32, %c0_i32_0 : i32, i32
  }
  func.func @transform_5(%arg0: i32) -> (i32, i32) {
    %c0_i32 = arith.constant 0 : i32
    %c0_i32_0 = arith.constant 0 : i32
    %c0_i32_1 = arith.constant 0 : i32
    return %c0_i32, %c0_i32_0 : i32, i32
  }
  func.func @transform_6(%arg0: i32) -> (i32, i32) {
    %c0_i32 = arith.constant 0 : i32
    %c0_i32_0 = arith.constant 0 : i32
    %c0_i32_1 = arith.constant 0 : i32
    return %c0_i32, %c0_i32_0 : i32, i32
  }
  func.func @transform_7(%arg0: i32) -> (i32, i32) {
    %c0_i32 = arith.constant 0 : i32
    %c0_i32_0 = arith.constant 0 : i32
    return %arg0, %c0_i32 : i32, i32
  }
}

</mosaic_0001>

<llo_original>
// kernel: tpu_custom_call.1
$region0: #{tpu_custom_call.1}
  #allocation0 [shape = 'u32[]', space=smem, size = 0x4, offset = 0x4, fixed_abs, tag = 'smem constant byte address 0x4 - core index']
  #allocation1 [shape = 'u32[72,128]{1,0:T(1,128)}', space=vmem, size = 0x9000, scoped, tag = 'internal scratch']
  %s0 = inlined_call_operand.hbm [shape: f32[16,16], index: 0, kind: input, shape index: {}]
  %s1 = inlined_call_operand.hbm [shape: f32[16,128], index: 1, kind: input, shape index: {}]
  %s2 = inlined_call_operand.vmem [shape: f32[1,128], index: 2, kind: input, shape index: {}]
  %s3 = inlined_call_operand.hbm [shape: f32[128,128], index: 3, kind: input, shape index: {}]
  %s4 = inlined_call_operand.vmem [shape: f32[1,128], index: 4, kind: input, shape index: {}]
  %s5 = inlined_call_operand.hbm [shape: f32[128,128], index: 5, kind: input, shape index: {}]
  %s6 = inlined_call_operand.vmem [shape: f32[1,128], index: 6, kind: input, shape index: {}]
  %s7 = inlined_call_operand.vmem [shape: f32[16,5], index: 7, kind: output, shape index: {}]
  %s8 = sld [smem:[#allocation0]]
  $region77: #{tpu_custom_call.1} parent=0
    _
  %s10 = ssub.s32 1, %s8
  %s11 = scalar_select 0, %s10, %s8
  $region1: #{tpu_custom_call.1} parent=0
    #allocation2 [shape = 'u8[8192]{0}', space=vmem, size = 0x2000, scoped, tag = 'input window, operand 0']
    #allocation3 [shape = 's32[2]{0}', space=sflag, size = 0x8, scoped, tag = 'scoped memory for tpu_custom_call.1']
    #allocation4 [shape = 'u8[8192]{0}', space=vmem, size = 0x2000, scoped, tag = 'input window, operand 1, single buffered']
    #allocation5 [shape = 's32[1]{0}', space=sflag, size = 0x4, scoped, tag = 'scoped memory for tpu_custom_call.1']
    #allocation6 [shape = 'u8[65536]{0}', space=vmem, size = 0x10000, scoped, tag = 'input window, operand 3, single buffered']
    #allocation7 [shape = 'u8[65536]{0}', space=vmem, size = 0x10000, scoped, tag = 'input window, operand 5, single buffered']
    #allocation8 [shape = 's32[1]{0}', space=sflag, size = 0x4, scoped, tag = 'scoped memory for tpu_custom_call.1']
    %12 = vsyncpa [#allocation3], 0
    %s13 = scalar_lea.sflag [#allocation3], 1
    %14 = vsyncpa %s13, 0
    %15 = vsyncpa [#allocation5], 0
    %16 = vsyncpa [#allocation8], 0
    loop: start=0, step=1, limit=4
    $region2: #{tpu_custom_call.1} parent=1 // loop_pre_header
      _
    $region3: #{tpu_custom_call.1} parent=1 // loop_header
      %s18 = sphi 0, %s22
      %p19 = scmp.ge.s32.totalorder %s18, 4
      %s28 = sphi 0, %s30
      %s31 = sphi 0, %s28
      %s32 = sphi 0, %s31
      %s48 = sphi 0, %s32
      %s52 = sphi 0, %s52
      %s54 = sphi 0, %s52
      %s55 = sphi 0, %s54
      %s69 = sphi 0, %s55
      %s73 = sphi 0, %s73
      %s75 = sphi 0, %s73
      %s76 = sphi 0, %s75
      %s90 = sphi 0, %s76
      %s94 = sphi 0, %s94
      %s96 = sphi 0, %s94
      %s97 = sphi 0, %s96
      %s111 = sphi 0, %s97
      %s115 = sphi 0, %s115
      %s117 = sphi 0, %s115
      %s118 = sphi 0, %s117
      %s132 = sphi 0, %s118
      %s136 = sphi 0, %s136
      %s138 = sphi 0, %s136
      %s139 = sphi 0, %s138
      %s153 = sphi 0, %s139
      %s157 = sphi 0, %s157
      %s159 = sphi 0, %s157
      %s160 = sphi 0, %s159
      %s174 = sphi 0, %s160
      %s180 = sphi 0, %s182
      %s183 = sphi 0, %s180
      %s184 = sphi 0, %s183
      %s200 = sphi 0, %s184
    $region4: #{tpu_custom_call.1} parent=1 // loop_header_branch
      %21 = sbr.rel (%p19) target = $region8
    $region5: #{tpu_custom_call.1} parent=1 // loop_body
      %s23 = ssub.s32 %s18, 1
      %s24 = ssub.s32 %s18, 2
      %s25 = sadd.s32 %s18, 1
      %s26 = ssub.s32 %s18, %s25
      %p27 = scmp.eq.s32.totalorder %s26, 0
      %s29 = sadd.s32 %s28, 1
      %s30 = scalar_select %p27, %s28, %s29
      %p33 = pneg %p27
      %p34 = scmp.eq.s32.totalorder %s18, 1
      %p35 = por %p33, %p34
      %p36 = scmp.ne.s32.totalorder %s28, %s31
      %p37 = scmp.eq.s32.totalorder %s18, 0
      %p38 = por %p36, %p37
      %p39 = scmp.ne.s32.totalorder %s28, %s31
      %p40 = scmp.eq.s32.totalorder %s23, 1
      %p41 = por %p39, %p40
      %p42 = scmp.ne.s32.totalorder %s31, %s32
      %p43 = scmp.eq.s32.totalorder %s23, 0
      %p44 = por %p42, %p43
      %p45 = scmp.ne.s32.totalorder %s31, %s32
      %p46 = scmp.eq.s32.totalorder %s24, 1
      %p47 = por %p45, %p46
      %p49 = scmp.ne.s32.totalorder %s32, %s48
      %p50 = scmp.eq.s32.totalorder %s24, 0
      %p51 = por %p49, %p50
      %s53 = sadd.s32 %s52, 1
      %p56 = scmp.eq.s32.totalorder %s18, 1
      %p57 = scmp.ne.s32.totalorder %s52, %s54
      %p58 = scmp.eq.s32.totalorder %s18, 0
      %p59 = por %p57, %p58
      %p60 = scmp.ne.s32.totalorder %s52, %s54
      %p61 = scmp.eq.s32.totalorder %s23, 1
      %p62 = por %p60, %p61
      %p63 = scmp.ne.s32.totalorder %s54, %s55
      %p64 = scmp.eq.s32.totalorder %s23, 0
      %p65 = por %p63, %p64
      %p66 = scmp.ne.s32.totalorder %s54, %s55
      %p67 = scmp.eq.s32.totalorder %s24, 1
      %p68 = por %p66, %p67
      %p70 = scmp.ne.s32.totalorder %s55, %s69
      %p71 = scmp.eq.s32.totalorder %s24, 0
      %p72 = por %p70, %p71
      %s74 = sadd.s32 %s73, 1
      %p77 = scmp.eq.s32.totalorder %s18, 1
      %p78 = scmp.ne.s32.totalorder %s73, %s75
      %p79 = scmp.eq.s32.totalorder %s18, 0
      %p80 = por %p78, %p79
      %p81 = scmp.ne.s32.totalorder %s73, %s75
      %p82 = scmp.eq.s32.totalorder %s23, 1
      %p83 = por %p81, %p82
      %p84 = scmp.ne.s32.totalorder %s75, %s76
      %p85 = scmp.eq.s32.totalorder %s23, 0
      %p86 = por %p84, %p85
      %p87 = scmp.ne.s32.totalorder %s75, %s76
      %p88 = scmp.eq.s32.totalorder %s24, 1
      %p89 = por %p87, %p88
      %p91 = scmp.ne.s32.totalorder %s76, %s90
      %p92 = scmp.eq.s32.totalorder %s24, 0
      %p93 = por %p91, %p92
      %s95 = sadd.s32 %s94, 1
      %p98 = scmp.eq.s32.totalorder %s18, 1
      %p99 = scmp.ne.s32.totalorder %s94, %s96
      %p100 = scmp.eq.s32.totalorder %s18, 0
      %p101 = por %p99, %p100
      %p102 = scmp.ne.s32.totalorder %s94, %s96
      %p103 = scmp.eq.s32.totalorder %s23, 1
      %p104 = por %p102, %p103
      %p105 = scmp.ne.s32.totalorder %s96, %s97
      %p106 = scmp.eq.s32.totalorder %s23, 0
      %p107 = por %p105, %p106
      %p108 = scmp.ne.s32.totalorder %s96, %s97
      %p109 = scmp.eq.s32.totalorder %s24, 1
      %p110 = por %p108, %p109
      %p112 = scmp.ne.s32.totalorder %s97, %s111
      %p113 = scmp.eq.s32.totalorder %s24, 0
      %p114 = por %p112, %p113
      %s116 = sadd.s32 %s115, 1
      %p119 = scmp.eq.s32.totalorder %s18, 1
      %p120 = scmp.ne.s32.totalorder %s115, %s117
      %p121 = scmp.eq.s32.totalorder %s18, 0
      %p122 = por %p120, %p121
      %p123 = scmp.ne.s32.totalorder %s115, %s117
      %p124 = scmp.eq.s32.totalorder %s23, 1
      %p125 = por %p123, %p124
      %p126 = scmp.ne.s32.totalorder %s117, %s118
      %p127 = scmp.eq.s32.totalorder %s23, 0
      %p128 = por %p126, %p127
      %p129 = scmp.ne.s32.totalorder %s117, %s118
      %p130 = scmp.eq.s32.totalorder %s24, 1
      %p131 = por %p129, %p130
      %p133 = scmp.ne.s32.totalorder %s118, %s132
      %p134 = scmp.eq.s32.totalorder %s24, 0
      %p135 = por %p133, %p134
      %s137 = sadd.s32 %s136, 1
      %p140 = scmp.eq.s32.totalorder %s18, 1
      %p141 = scmp.ne.s32.totalorder %s136, %s138
      %p142 = scmp.eq.s32.totalorder %s18, 0
      %p143 = por %p141, %p142
      %p144 = scmp.ne.s32.totalorder %s136, %s138
      %p145 = scmp.eq.s32.totalorder %s23, 1
      %p146 = por %p144, %p145
      %p147 = scmp.ne.s32.totalorder %s138, %s139
      %p148 = scmp.eq.s32.totalorder %s23, 0
      %p149 = por %p147, %p148
      %p150 = scmp.ne.s32.totalorder %s138, %s139
      %p151 = scmp.eq.s32.totalorder %s24, 1
      %p152 = por %p150, %p151
      %p154 = scmp.ne.s32.totalorder %s139, %s153
      %p155 = scmp.eq.s32.totalorder %s24, 0
      %p156 = por %p154, %p155
      %s158 = sadd.s32 %s157, 1
      %p161 = scmp.eq.s32.totalorder %s18, 1
      %p162 = scmp.ne.s32.totalorder %s157, %s159
      %p163 = scmp.eq.s32.totalorder %s18, 0
      %p164 = por %p162, %p163
      %p165 = scmp.ne.s32.totalorder %s157, %s159
      %p166 = scmp.eq.s32.totalorder %s23, 1
      %p167 = por %p165, %p166
      %p168 = scmp.ne.s32.totalorder %s159, %s160
      %p169 = scmp.eq.s32.totalorder %s23, 0
      %p170 = por %p168, %p169
      %p171 = scmp.ne.s32.totalorder %s159, %s160
      %p172 = scmp.eq.s32.totalorder %s24, 1
      %p173 = por %p171, %p172
      %p175 = scmp.ne.s32.totalorder %s160, %s174
      %p176 = scmp.eq.s32.totalorder %s24, 0
      %p177 = por %p175, %p176
      %s178 = ssub.s32 %s18, %s25
      %p179 = scmp.eq.s32.totalorder %s178, 0
      %s181 = sadd.s32 %s180, 1
      %s182 = scalar_select %p179, %s180, %s181
      %p185 = pneg %p179
      %p186 = scmp.eq.s32.totalorder %s18, 1
      %p187 = por %p185, %p186
      %p188 = scmp.ne.s32.totalorder %s180, %s183
      %p189 = scmp.eq.s32.totalorder %s18, 0
      %p190 = por %p188, %p189
      %p191 = scmp.ne.s32.totalorder %s180, %s183
      %p192 = scmp.eq.s32.totalorder %s23, 1
      %p193 = por %p191, %p192
      %p194 = scmp.ne.s32.totalorder %s183, %s184
      %p195 = scmp.eq.s32.totalorder %s23, 0
      %p196 = por %p194, %p195
      %p197 = scmp.ne.s32.totalorder %s183, %s184
      %p198 = scmp.eq.s32.totalorder %s24, 1
      %p199 = por %p197, %p198
      %p201 = scmp.ne.s32.totalorder %s184, %s200
      %p202 = scmp.eq.s32.totalorder %s24, 0
      %p203 = por %p201, %p202
      %p204 = scmp.le.s32.totalorder 1, %s18
      %p205 = scmp.lt.s32.totalorder %s18, 3
      %p206 = pnand %p204, %p205
      %p207 = pneg %p206
      // Predicated region
      $region9: #{tpu_custom_call.1} parent=5 // pred_check
        _
      $region10: #{tpu_custom_call.1} parent=5 // pred_check_branch
        %209 = sbr.rel (%p206) target = $region12
      $region11: #{tpu_custom_call.1} parent=5 // pred_region
        %s210 = ssub.s32 %s18, 1
        // Predicated region
        $region13: #{tpu_custom_call.1} parent=11 // pred_check
          %p211 = pneg %p65
        $region14: #{tpu_custom_call.1} parent=11 // pred_check_branch
          %213 = sbr.rel (%p211) target = $region16
        $region15: #{tpu_custom_call.1} parent=11 // pred_region
          %215 = vsyncadd [#allocation5], 0
          %s216 = sshll.u32 %s1, 4
          %s217 = int_to_ptr.hbm [resolvable:$true] %s216
          %s218 = sshll.u32 [#allocation4], 4
          %s219 = int_to_ptr.vmem [resolvable:$true] %s218
          %224 = dma.hbm_to_vmem [thread:$0]  %s217, 256, %s219, [#allocation5], 128, 128, 8
        $region16: #{tpu_custom_call.1} parent=11 // pred_fallthru
          _
        // Predicated region
        $region17: #{tpu_custom_call.1} parent=11 // pred_check
          %p225 = pneg %p86
        $region18: #{tpu_custom_call.1} parent=11 // pred_check_branch
          %227 = sbr.rel (%p225) target = $region20
        $region19: #{tpu_custom_call.1} parent=11 // pred_region
          _
        $region20: #{tpu_custom_call.1} parent=11 // pred_fallthru
          _
        // Predicated region
        $region21: #{tpu_custom_call.1} parent=11 // pred_check
          %p228 = pneg %p107
        $region22: #{tpu_custom_call.1} parent=11 // pred_check_branch
          %230 = sbr.rel (%p228) target = $region24
        $region23: #{tpu_custom_call.1} parent=11 // pred_region
          %232 = vsyncadd [#allocation5], 0
          %s233 = sshll.u32 %s3, 4
          %s234 = int_to_ptr.hbm [resolvable:$true] %s233
          %s235 = sshll.u32 [#allocation6], 4
          %s236 = int_to_ptr.vmem [resolvable:$true] %s235
          %241 = dma.hbm_to_vmem [thread:$0]  %s234, 2048, %s236, [#allocation5], 128, 128, 8
        $region24: #{tpu_custom_call.1} parent=11 // pred_fallthru
          _
        // Predicated region
        $region25: #{tpu_custom_call.1} parent=11 // pred_check
          %p242 = pneg %p128
        $region26: #{tpu_custom_call.1} parent=11 // pred_check_branch
          %244 = sbr.rel (%p242) target = $region28
        $region27: #{tpu_custom_call.1} parent=11 // pred_region
          _
        $region28: #{tpu_custom_call.1} parent=11 // pred_fallthru
          _
        // Predicated region
        $region29: #{tpu_custom_call.1} parent=11 // pred_check
          %p245 = pneg %p149
        $region30: #{tpu_custom_call.1} parent=11 // pred_check_branch
          %247 = sbr.rel (%p245) target = $region32
        $region31: #{tpu_custom_call.1} parent=11 // pred_region
          %249 = vsyncadd [#allocation8], 0
          %s250 = sshll.u32 %s5, 4
          %s251 = int_to_ptr.hbm [resolvable:$true] %s250
          %s252 = sshll.u32 [#allocation7], 4
          %s253 = int_to_ptr.vmem [resolvable:$true] %s252
          %258 = dma.hbm_to_vmem [thread:$0]  %s251, 2048, %s253, [#allocation8], 128, 128, 8
        $region32: #{tpu_custom_call.1} parent=11 // pred_fallthru
          _
        // Predicated region
        $region33: #{tpu_custom_call.1} parent=11 // pred_check
          %p259 = pneg %p170
        $region34: #{tpu_custom_call.1} parent=11 // pred_check_branch
          %261 = sbr.rel (%p259) target = $region36
        $region35: #{tpu_custom_call.1} parent=11 // pred_region
          _
        $region36: #{tpu_custom_call.1} parent=11 // pred_fallthru
          _
      $region12: #{tpu_custom_call.1} parent=5 // pred_fallthru
        _
      %p262 = scmp.lt.s32.totalorder %s18, 2
      // Predicated region
      $region37: #{tpu_custom_call.1} parent=5 // pred_check
        %p263 = pneg %p262
      $region38: #{tpu_custom_call.1} parent=5 // pred_check_branch
        %265 = sbr.rel (%p263) target = $region40
      $region39: #{tpu_custom_call.1} parent=5 // pred_region
        // Predicated region
        $region41: #{tpu_custom_call.1} parent=39 // pred_check
          %p266 = pneg %p38
        $region42: #{tpu_custom_call.1} parent=39 // pred_check_branch
          %268 = sbr.rel (%p266) target = $region44
        $region43: #{tpu_custom_call.1} parent=39 // pred_region
          %s269 = sand.u32 %s28, 1
          %s270 = scalar_lea.sflag [#allocation3], %s269
          %s271 = sand.u32 %s28, 1
          %s272 = smul.addr %s271, 8
          %s273 = scalar_lea.vmem [#allocation2], %s272
          %275 = vsyncadd %s270, 0
          %s276 = smul.addr %s18, 8
          %s277 = scalar_lea.hbm %s0, %s276
          %s279 = sshll.u32 %s277, 4
          %s280 = int_to_ptr.hbm [resolvable:$true] %s279
          %s281 = sshll.u32 %s273, 4
          %s282 = int_to_ptr.vmem [resolvable:$true] %s281
          %284 = dma.hbm_to_vmem [thread:$0]  %s280, 128, %s282, %s270
        $region44: #{tpu_custom_call.1} parent=39 // pred_fallthru
          _
      $region40: #{tpu_custom_call.1} parent=5 // pred_fallthru
        _
      %p285 = scmp.le.s32.totalorder 1, %s18
      %p286 = scmp.lt.s32.totalorder %s18, 3
      %p287 = pnand %p285, %p286
      %p288 = pneg %p287
      // Predicated region
      $region45: #{tpu_custom_call.1} parent=5 // pred_check
        _
      $region46: #{tpu_custom_call.1} parent=5 // pred_check_branch
        %290 = sbr.rel (%p287) target = $region48
      $region47: #{tpu_custom_call.1} parent=5 // pred_region
        %s291 = ssub.s32 %s18, 1
        %s292 = sand.u32 %s31, 1
        %s293 = scalar_lea.sflag [#allocation3], %s292
        %s294 = sand.u32 %s31, 1
        %s295 = smul.addr %s294, 8
        %s296 = scalar_lea.vmem [#allocation2], %s295
        // Predicated region
        $region49: #{tpu_custom_call.1} parent=47 // pred_check
          %p297 = pneg %p44
        $region50: #{tpu_custom_call.1} parent=47 // pred_check_branch
          %299 = sbr.rel (%p297) target = $region52
        $region51: #{tpu_custom_call.1} parent=47 // pred_region
          %301 = dma.done %s293, 128
        $region52: #{tpu_custom_call.1} parent=47 // pred_fallthru
          _
        // Predicated region
        $region53: #{tpu_custom_call.1} parent=47 // pred_check
          %p302 = pneg %p65
        $region54: #{tpu_custom_call.1} parent=47 // pred_check_branch
          %304 = sbr.rel (%p302) target = $region56
        $region55: #{tpu_custom_call.1} parent=47 // pred_region
          %306 = dma.done [#allocation5], 256
        $region56: #{tpu_custom_call.1} parent=47 // pred_fallthru
          _
        // Predicated region
        $region57: #{tpu_custom_call.1} parent=47 // pred_check
          %p307 = pneg %p107
        $region58: #{tpu_custom_call.1} parent=47 // pred_check_branch
          %309 = sbr.rel (%p307) target = $region60
        $region59: #{tpu_custom_call.1} parent=47 // pred_region
          %311 = dma.done [#allocation5], 2048
        $region60: #{tpu_custom_call.1} parent=47 // pred_fallthru
          _
        // Predicated region
        $region61: #{tpu_custom_call.1} parent=47 // pred_check
          %p312 = pneg %p149
        $region62: #{tpu_custom_call.1} parent=47 // pred_check_branch
          %314 = sbr.rel (%p312) target = $region64
        $region63: #{tpu_custom_call.1} parent=47 // pred_region
          %316 = dma.done [#allocation8], 2048
        $region64: #{tpu_custom_call.1} parent=47 // pred_fallthru
          _
        %s317 = sand.u32 %s31, 1
        %s318 = scalar_lea.sflag [#allocation3], %s317
        %s319 = sand.u32 %s31, 1
        %s320 = smul.addr %s319, 8
        %s321 = scalar_lea.vmem [#allocation2], %s320
        %p322 = pneg %p44
        %p323 = pneg %p41
        %p324 = pneg %p65
        %p325 = pneg %p62
        %p326 = pneg %p86
        %p327 = pneg %p83
        %p328 = pneg %p107
        %p329 = pneg %p104
        %p330 = pneg %p128
        %p331 = pneg %p125
        %p332 = pneg %p149
        %p333 = pneg %p146
        %p334 = pneg %p170
        %p335 = pneg %p167
        %p336 = pneg %p196
        %p337 = pneg %p193
        %p338 = scmp.lt.s32.totalorder %s23, 1
        %s339 = scalar_select %p338, %s23, 1
        %s340 = smul.addr %s339, 8
        %s341 = scalar_lea.vmem %s7, %s340
        %p342 = scmp.lt.s32.totalorder %s23, 1
        %s343 = scalar_select %p342, %s23, 1
        %s344 = smul.addr %s343, 8
        %s345 = scalar_lea.vmem %s7, %s344
        %v346 = vld [vmem:[%s296] sm:$0xff]
        %v347 = vld [vmem:[#allocation4] sm:$0xff]
        %v348 = vld [vmem:[#allocation4 + $0x8] sm:$0xff]
        %v349 = vld [vmem:[%s2] sm:$0x1]
        %v351 = vperm.slane %v349, 0
        %vm353 = vcmask 130048
        %v355 = vsel %vm353, %v346, 0
        %357 = vmatpush.msra.mxu0 0.0
        %358 = vmatpush.msra.mxu0 0.0
        %359 = vmatpush.msra.mxu0 0.0
        %360 = vmatpush.msra.mxu0 0.0
        %361 = vmatpush.msra.mxu0 0.0
        %362 = vmatpush.msra.mxu0 0.0
        %363 = vmatpush.msra.mxu0 0.0
        %364 = vmatpush.msra.mxu0 0.0
        %365 = vmatpush.msra.mxu0 0.0
        %366 = vmatpush.msra.mxu0 0.0
        %367 = vmatpush.msra.mxu0 0.0
        %368 = vmatpush.msra.mxu0 0.0
        %369 = vmatpush.msra.mxu0 0.0
        %370 = vmatpush.msra.mxu0 0.0
        %371 = vmatpush.msra.mxu0 %v348
        %372 = vmatpush.msra.mxu0 %v347
        %373 = vmatmul.f32.gmra.mxu0 %v355
        %v374 = vpop.f32.mrf.mxu0
        %v375 = vadd.f32 %v351, %v374
        %376 = vdwg.mxu0
        %v377 = vtanh.pop %v375
        %v378 = vld [vmem:[#allocation6] sm:$0xff]
        %v379 = vld [vmem:[#allocation6 + $0x8] sm:$0xff]
        %v380 = vld [vmem:[#allocation6 + $0x10] sm:$0xff]
        %v381 = vld [vmem:[#allocation6 + $0x18] sm:$0xff]
        %v382 = vld [vmem:[#allocation6 + $0x20] sm:$0xff]
        %v383 = vld [vmem:[#allocation6 + $0x28] sm:$0xff]
        %v384 = vld [vmem:[#allocation6 + $0x30] sm:$0xff]
        %v385 = vld [vmem:[#allocation6 + $0x38] sm:$0xff]
        %v386 = vld [vmem:[#allocation6 + $0x40] sm:$0xff]
        %v387 = vld [vmem:[#allocation6 + $0x48] sm:$0xff]
        %v388 = vld [vmem:[#allocation6 + $0x50] sm:$0xff]
        %v389 = vld [vmem:[#allocation6 + $0x58] sm:$0xff]
        %v390 = vld [vmem:[#allocation6 + $0x60] sm:$0xff]
        %v391 = vld [vmem:[#allocation6 + $0x68] sm:$0xff]
        %v392 = vld [vmem:[#allocation6 + $0x70] sm:$0xff]
        %v393 = vld [vmem:[#allocation6 + $0x78] sm:$0xff]
        %v394 = vld [vmem:[%s4] sm:$0x1]
        %v396 = vperm.slane %v394, 0
        %398 = vmatpush.msra.mxu0 %v393
        %399 = vmatpush.msra.mxu0 %v392
        %400 = vmatpush.msra.mxu0 %v391
        %401 = vmatpush.msra.mxu0 %v390
        %402 = vmatpush.msra.mxu0 %v389
        %403 = vmatpush.msra.mxu0 %v388
        %404 = vmatpush.msra.mxu0 %v387
        %405 = vmatpush.msra.mxu0 %v386
        %406 = vmatpush.msra.mxu0 %v385
        %407 = vmatpush.msra.mxu0 %v384
        %408 = vmatpush.msra.mxu0 %v383
        %409 = vmatpush.msra.mxu0 %v382
        %410 = vmatpush.msra.mxu0 %v381
        %411 = vmatpush.msra.mxu0 %v380
        %412 = vmatpush.msra.mxu0 %v379
        %413 = vmatpush.msra.mxu0 %v378
        %414 = vmatmul.f32.gmra.mxu0 %v377
        %v415 = vpop.f32.mrf.mxu0
        %v416 = vadd.f32 %v396, %v415
        %417 = vdwg.mxu0
        %v418 = vtanh.pop %v416
        %v419 = vld [vmem:[#allocation7] sm:$0xff]
        %v420 = vld [vmem:[#allocation7 + $0x8] sm:$0xff]
        %v421 = vld [vmem:[#allocation7 + $0x10] sm:$0xff]
        %v422 = vld [vmem:[#allocation7 + $0x18] sm:$0xff]
        %v423 = vld [vmem:[#allocation7 + $0x20] sm:$0xff]
        %v424 = vld [vmem:[#allocation7 + $0x28] sm:$0xff]
        %v425 = vld [vmem:[#allocation7 + $0x30] sm:$0xff]
        %v426 = vld [vmem:[#allocation7 + $0x38] sm:$0xff]
        %v427 = vld [vmem:[#allocation7 + $0x40] sm:$0xff]
        %v428 = vld [vmem:[#allocation7 + $0x48] sm:$0xff]
        %v429 = vld [vmem:[#allocation7 + $0x50] sm:$0xff]
        %v430 = vld [vmem:[#allocation7 + $0x58] sm:$0xff]
        %v431 = vld [vmem:[#allocation7 + $0x60] sm:$0xff]
        %v432 = vld [vmem:[#allocation7 + $0x68] sm:$0xff]
        %v433 = vld [vmem:[#allocation7 + $0x70] sm:$0xff]
        %v434 = vld [vmem:[#allocation7 + $0x78] sm:$0xff]
        %v435 = vld [vmem:[%s6] sm:$0x1]
        %v437 = vperm.slane %v435, 0
        %439 = vmatpush.msra.mxu0 %v434
        %440 = vmatpush.msra.mxu0 %v433
        %441 = vmatpush.msra.mxu0 %v432
        %442 = vmatpush.msra.mxu0 %v431
        %443 = vmatpush.msra.mxu0 %v430
        %444 = vmatpush.msra.mxu0 %v429
        %445 = vmatpush.msra.mxu0 %v428
        %446 = vmatpush.msra.mxu0 %v427
        %447 = vmatpush.msra.mxu0 %v426
        %448 = vmatpush.msra.mxu0 %v425
        %449 = vmatpush.msra.mxu0 %v424
        %450 = vmatpush.msra.mxu0 %v423
        %451 = vmatpush.msra.mxu0 %v422
        %452 = vmatpush.msra.mxu0 %v421
        %453 = vmatpush.msra.mxu0 %v420
        %454 = vmatpush.msra.mxu0 %v419
        %455 = vmatmul.f32.gmra.mxu0 %v418
        %v456 = vpop.f32.mrf.mxu0
        %v457 = vadd.f32 %v437, %v456
        %458 = vdwg.mxu0
        %vm459 = vcmask 39936
        %460 = vst.msk [vmem:[%s345] sm:$0xff] %vm459, %v457
        %p461 = scmp.lt.s32.totalorder %s23, 1
        %s462 = scalar_select %p461, %s23, 1
        %s463 = smul.addr %s462, 8
        %s464 = scalar_lea.vmem %s7, %s463
        // Predicated region
        $region65: #{tpu_custom_call.1} parent=47 // pred_check
          %p465 = pneg %p193
        $region66: #{tpu_custom_call.1} parent=47 // pred_check_branch
          %467 = sbr.rel (%p465) target = $region68
        $region67: #{tpu_custom_call.1} parent=47 // pred_region
          _
        $region68: #{tpu_custom_call.1} parent=47 // pred_fallthru
          _
      $region48: #{tpu_custom_call.1} parent=5 // pred_fallthru
        _
      %p468 = scmp.le.s32.totalorder 2, %s18
      // Predicated region
      $region69: #{tpu_custom_call.1} parent=5 // pred_check
        %p469 = pneg %p468
      $region70: #{tpu_custom_call.1} parent=5 // pred_check_branch
        %471 = sbr.rel (%p469) target = $region72
      $region71: #{tpu_custom_call.1} parent=5 // pred_region
        %s472 = ssub.s32 %s18, 2
        // Predicated region
        $region73: #{tpu_custom_call.1} parent=71 // pred_check
          %p473 = pneg %p199
        $region74: #{tpu_custom_call.1} parent=71 // pred_check_branch
          %475 = sbr.rel (%p473) target = $region76
        $region75: #{tpu_custom_call.1} parent=71 // pred_region
          %p476 = scmp.lt.s32.totalorder %s24, 1
          %s477 = scalar_select %p476, %s24, 1
          %s478 = smul.addr %s477, 8
          %s479 = scalar_lea.vmem %s7, %s478
        $region76: #{tpu_custom_call.1} parent=71 // pred_fallthru
          _
      $region72: #{tpu_custom_call.1} parent=5 // pred_fallthru
        _
    $region6: #{tpu_custom_call.1} parent=1 // loop_footer
      %s22 = sadd.s32 1, %s18
    $region7: #{tpu_custom_call.1} parent=1 // loop_footer_branch
      %17 = sbr.rel target = $region3
    $region8: #{tpu_custom_call.1} parent=1 // loop_exit
      _
    %480 = vsyncpa [#allocation3], 1
    %s481 = scalar_lea.sflag [#allocation3], 1
    %482 = vsyncpa %s481, 1
    %483 = vsyncpa [#allocation5], 1
    %484 = vsyncpa [#allocation8], 1

</llo_original>
